<compile_context>
chip_gen: v5e
topology: v5e:2x2
jax: 0.10.0
libtpu: 0.0.40
codegen_flags: <defaults>
</compile_context>

<pallas_src>
import math
import jax
import jax.numpy as jnp
from jax.experimental import pallas as pl
from jax.experimental.pallas import tpu as pltpu


def _round_up(a: int, b: int) -> int:
    return ((a + b - 1) // b) * b


# --------------------------------------------------------------------------
# Kernels
# --------------------------------------------------------------------------
def _ffn_kernel_f32_out(x_ref, w1_ref, b1_ref, w2_ref, b2_ref, o_ref):
    """f32 output: accumulate directly into the resident output block."""
    # x_ref:  (tm, d_model_p)     w1_ref: (d_model_p, tk)  b1_ref: (1, tk)
    # w2_ref: (tk, d_model_p)     b2_ref: (1, d_model_p)   o_ref: (tm, d_model_p) f32
    k = pl.program_id(1)

    h = jnp.dot(x_ref[...], w1_ref[...], preferred_element_type=jnp.float32)
    h = jnp.maximum(h + b1_ref[...], 0.0)
    # Dropout: identity in eval mode.
    contrib = jnp.dot(
        h.astype(w2_ref.dtype), w2_ref[...], preferred_element_type=jnp.float32
    )

    @pl.when(k == 0)
    def _():
        o_ref[...] = contrib + b2_ref[...]

    @pl.when(k != 0)
    def _():
        o_ref[...] += contrib


def _ffn_kernel_scratch(x_ref, w1_ref, b1_ref, w2_ref, b2_ref, o_ref, acc_ref):
    """Non-f32 output (e.g. bf16): f32 scratch accumulator, cast on last k."""
    k = pl.program_id(1)

    @pl.when(k == 0)
    def _():
        acc_ref[...] = jnp.zeros_like(acc_ref)

    h = jnp.dot(x_ref[...], w1_ref[...], preferred_element_type=jnp.float32)
    h = jnp.maximum(h + b1_ref[...], 0.0)
    # Dropout: identity in eval mode.
    acc_ref[...] += jnp.dot(
        h.astype(w2_ref.dtype), w2_ref[...], preferred_element_type=jnp.float32
    )

    @pl.when(k == pl.num_programs(1) - 1)
    def _():
        o_ref[...] = (acc_ref[...] + b2_ref[...]).astype(o_ref.dtype)


# --------------------------------------------------------------------------
# Generation-aware tile selection
# --------------------------------------------------------------------------
def _vmem_capacity_bytes() -> int:
    try:
        return int(pltpu.get_tpu_info().vmem_capacity_bytes)
    except Exception:
        return 64 * 1024 * 1024  # conservative (fits v7x)


def _footprint(tm, tk, d_model_p, x_item, w_item, out_item) -> int:
    """Approximate VMEM footprint with default double-buffering."""
    x_db = 2 * tm * d_model_p * x_item
    w1_db = 2 * d_model_p * tk * w_item
    b1_db = 2 * tk * 4
    w2_db = 2 * tk * d_model_p * w_item
    b2_db = 2 * d_model_p * 4
    out_db = 2 * tm * d_model_p * out_item
    acc = tm * d_model_p * 4          # assume scratch accumulator (worst case)
    h = tm * tk * 4                   # f32 intermediate
    return x_db + w1_db + b1_db + w2_db + b2_db + out_db + acc + h


def _select_tiles(d_model_p, x_item, w_item, out_item, budget):
    # Prioritize tm (arithmetic intensity), then tk (per-step overhead).
    for tm in (512, 384, 256, 128, 64):
        for tk in (1024, 512, 256, 128):
            if _footprint(tm, tk, d_model_p, x_item, w_item, out_item) <= budget:
                return tm, tk
    return 64, 128


# --------------------------------------------------------------------------
# Wrapper: pad/cast weights once, return a fast apply(x) closure
# --------------------------------------------------------------------------
def make_feed_forward(w1, b1, w2, b2, *, tm=None, tk=None, vmem_limit_bytes=None):
    """w1: (d_model, d_ff), b1: (d_ff,), w2: (d_ff, d_model), b2: (d_model,).

    Weights are padded/cast exactly once here (not per call). Returns apply(x)
    for x of shape (batch, seq, d_model).
    """
    d_model, d_ff = w1.shape
    d_model_p = _round_up(d_model, 128)

    w_item = jnp.dtype(w1.dtype).itemsize
    vmem_cap = _vmem_capacity_bytes()
    budget = int(vmem_cap * 0.85)  # headroom for Mosaic internal scratch
    if vmem_limit_bytes is None:
        vmem_limit_bytes = budget

    sel_tm, sel_tk = _select_tiles(d_model_p, w_item, w_item, w_item, budget)
    if tm is None:
        tm = sel_tm
    if tk is None:
        tk = sel_tk
    tk = min(tk, _round_up(d_ff, 128))      # lanes multiple of 128
    tm = max(8, (tm // 8) * 8)              # sublanes multiple of 8

    d_ff_p = _round_up(d_ff, tk)
    n_ff_tiles = d_ff_p // tk

    # ---- one-time weight/bias padding (kept out of the per-call path) ----
    w1_p = jnp.pad(w1, ((0, d_model_p - d_model), (0, d_ff_p - d_ff)))
    b1_p = jnp.pad(b1.astype(jnp.float32), (0, d_ff_p - d_ff)).reshape(1, d_ff_p)
    w2_p = jnp.pad(w2, ((0, d_ff_p - d_ff), (0, d_model_p - d_model)))
    b2_p = jnp.pad(b2.astype(jnp.float32), (0, d_model_p - d_model)).reshape(
        1, d_model_p)

    # Serpentine d_ff index: odd row tiles walk backwards so the boundary
    # W1/W2 slice DMA is reused between consecutive row tiles.
    def _serp(i, k):
        rev = i % 2
        return k + rev * (n_ff_tiles - 1 - 2 * k)

    def apply(x):
        batch, seq, d_model_in = x.shape
        assert d_model_in == d_model, "x last dim must equal d_model"
        M = batch * seq

        tm_eff = min(tm, _round_up(M, 8))
        m_p = _round_up(M, tm_eff)
        n_row_tiles = m_p // tm_eff

        x2d = x.reshape(M, d_model)
        if m_p != M or d_model_p != d_model:
            x2d = jnp.pad(x2d, ((0, m_p - M), (0, d_model_p - d_model)))

        out_dtype = x.dtype
        use_scratch = out_dtype != jnp.float32
        kernel = _ffn_kernel_scratch if use_scratch else _ffn_kernel_f32_out
        scratch_shapes = (
            [pltpu.VMEM((tm_eff, d_model_p), jnp.float32)] if use_scratch else []
        )

        # Advisory cost estimate for XLA's scheduler.
        x_item = jnp.dtype(x.dtype).itemsize
        flops = 4 * M * d_model * d_ff  # two matmuls, 2*M*N*K each
        bytes_accessed = (
            (x2d.size + m_p * d_model_p) * x_item              # x in, out
            + n_row_tiles * (w1_p.size + w2_p.size) * w_item   # weights streamed/row tile
            + (b1_p.size + b2_p.size) * 4
        )

        out2d = pl.pallas_call(
            kernel,
            out_shape=jax.ShapeDtypeStruct((m_p, d_model_p), out_dtype),
            grid_spec=pltpu.PrefetchScalarGridSpec(
                num_scalar_prefetch=0,
                grid=(n_row_tiles, n_ff_tiles),
                in_specs=[
                    pl.BlockSpec((tm_eff, d_model_p), lambda i, k: (i, 0)),       # x rows
                    pl.BlockSpec((d_model_p, tk), lambda i, k: (0, _serp(i, k))),  # W1 slice
                    pl.BlockSpec((1, tk), lambda i, k: (0, _serp(i, k))),          # b1 slice
                    pl.BlockSpec((tk, d_model_p), lambda i, k: (_serp(i, k), 0)),  # W2 slice
                    pl.BlockSpec((1, d_model_p), lambda i, k: (0, 0)),             # b2
                ],
                out_specs=pl.BlockSpec((tm_eff, d_model_p), lambda i, k: (i, 0)),
                scratch_shapes=scratch_shapes,
            ),
            compiler_params=pltpu.CompilerParams(
                dimension_semantics=("parallel", "arbitrary"),
                vmem_limit_bytes=vmem_limit_bytes,
            ),
            cost_estimate=pl.CostEstimate(
                flops=flops, transcendentals=0, bytes_accessed=bytes_accessed),
        )(x2d, w1_p, b1_p, w2_p, b2_p)

        return out2d[:M, :d_model].reshape(batch, seq, d_model)

    return apply


def feed_forward_block(x, w1, b1, w2, b2, **kwargs):
    """One-shot convenience wrapper (re-pads weights every call — prefer
    make_feed_forward(...) in real use so padding happens once)."""
    return make_feed_forward(w1, b1, w2, b2, **kwargs)(x)


def init_params(key, d_model, d_ff):
    """Deterministic init mimicking nn.Linear defaults (uniform +/- 1/sqrt(fan_in))."""
    k1, k2, k3, k4 = jax.random.split(key, 4)
    bound1 = 1.0 / math.sqrt(d_model)
    bound2 = 1.0 / math.sqrt(d_ff)
    # Stored pre-transposed relative to PyTorch: W1 is (d_model, d_ff) so that
    # x @ W1 == x @ torch_W1.T.
    w1 = jax.random.uniform(k1, (d_model, d_ff), jnp.float32, -bound1, bound1)
    b1 = jax.random.uniform(k2, (d_ff,), jnp.float32, -bound1, bound1)
    w2 = jax.random.uniform(k3, (d_ff, d_model), jnp.float32, -bound2, bound2)
    b2 = jax.random.uniform(k4, (d_model,), jnp.float32, -bound2, bound2)
    return w1, b1, w2, b2


if __name__ == "__main__":
    batch, seq, d_model, d_ff = 2, 8, 32, 64

    key = jax.random.PRNGKey(0)
    kx, kp = jax.random.split(key)
    x = jax.random.normal(kx, (batch, seq, d_model), jnp.float32)
    w1, b1, w2, b2 = init_params(kp, d_model, d_ff)

    ref = jnp.maximum(x @ w1 + b1, 0.0) @ w2 + b2

    # f32 path: accumulates directly into the resident output block.
    ffn_f32 = make_feed_forward(w1, b1, w2, b2)
    out = jax.block_until_ready(ffn_f32(x))
    assert out.shape == (batch, seq, d_model)
    assert jnp.allclose(out, ref, atol=2e-5, rtol=2e-5)

    # bf16 path: MXU-native dtype, f32 scratch accumulation, bf16 writeback.
    ffn_bf16 = make_feed_forward(
        w1.astype(jnp.bfloat16), b1, w2.astype(jnp.bfloat16), b2)
    outb = jax.block_until_ready(ffn_bf16(x.astype(jnp.bfloat16)))
    assert outb.shape == (batch, seq, d_model) and outb.dtype == jnp.bfloat16
    assert jnp.allclose(outb.astype(jnp.float32), ref, atol=8e-2, rtol=8e-2)

    print("KERNEL_OK")
</pallas_src>

<mosaic_0001>
module attributes {stable_mosaic.version = 11 : i64} {
  func.func @_ffn_kernel_f32_out(%arg0: i32, %arg1: i32, %arg2: memref<16x128xf32, #tpu.memory_space<vmem>>, %arg3: memref<128x128xf32, #tpu.memory_space<vmem>>, %arg4: memref<1x128xf32, #tpu.memory_space<vmem>>, %arg5: memref<128x128xf32, #tpu.memory_space<vmem>>, %arg6: memref<1x128xf32, #tpu.memory_space<vmem>>, %arg7: memref<16x128xf32, #tpu.memory_space<vmem>>) attributes {dimension_semantics = [#tpu.dimension_semantics<parallel>, #tpu.dimension_semantics<arbitrary>], iteration_bounds = array<i64: 1, 1>, scalar_prefetch = 0 : i64, scratch_operands = 0 : i64, tpu.core_type = #tpu.core_type<tc>, window_params = [{transform_indices = @transform_0, window_bounds = array<i64: 16, 128>}, {transform_indices = @transform_1, window_bounds = array<i64: 128, 128>}, {transform_indices = @transform_2, window_bounds = array<i64: 1, 128>}, {transform_indices = @transform_3, window_bounds = array<i64: 128, 128>}, {pipeline_mode = #tpu.pipeline_mode<synchronous>, transform_indices = @transform_4, window_bounds = array<i64: 1, 128>}, {transform_indices = @transform_5, window_bounds = array<i64: 16, 128>}]} {
    %c0 = arith.constant 0 : index
    %c0_0 = arith.constant 0 : index
    %0 = vector.load %arg2[%c0, %c0_0] : memref<16x128xf32, #tpu.memory_space<vmem>>, vector<16x128xf32>
    %c0_1 = arith.constant 0 : index
    %c0_2 = arith.constant 0 : index
    %1 = vector.load %arg3[%c0_1, %c0_2] : memref<128x128xf32, #tpu.memory_space<vmem>>, vector<128x128xf32>
    %cst = arith.constant dense<0.000000e+00> : vector<16x128xf32>
    %2 = tpu.matmul %0, %1, %cst {dimension_numbers = #tpu.dot_dimension_numbers<[1], [0], [0], [1], [0, 0, 1, 1], [], []>} : vector<16x128xf32>, vector<128x128xf32>, vector<16x128xf32> -> vector<16x128xf32>
    %c0_3 = arith.constant 0 : index
    %c0_4 = arith.constant 0 : index
    %3 = vector.load %arg4[%c0_3, %c0_4] : memref<1x128xf32, #tpu.memory_space<vmem>>, vector<1x128xf32>
    %4 = vector.broadcast %3 : vector<1x128xf32> to vector<16x128xf32>
    %5 = arith.addf %2, %4 : vector<16x128xf32>
    %cst_5 = arith.constant 0.000000e+00 : f32
    %6 = vector.broadcast %cst_5 : f32 to vector<16x128xf32>
    %7 = arith.maximumf %5, %6 : vector<16x128xf32>
    %c0_6 = arith.constant 0 : index
    %c0_7 = arith.constant 0 : index
    %8 = vector.load %arg5[%c0_6, %c0_7] : memref<128x128xf32, #tpu.memory_space<vmem>>, vector<128x128xf32>
    %cst_8 = arith.constant dense<0.000000e+00> : vector<16x128xf32>
    %9 = tpu.matmul %7, %8, %cst_8 {dimension_numbers = #tpu.dot_dimension_numbers<[1], [0], [0], [1], [0, 0, 1, 1], [], []>} : vector<16x128xf32>, vector<128x128xf32>, vector<16x128xf32> -> vector<16x128xf32>
    %c0_i32 = arith.constant 0 : i32
    %10 = arith.cmpi eq, %arg1, %c0_i32 : i32
    %11 = arith.extui %10 : i1 to i32
    %c0_i32_9 = arith.constant 0 : i32
    %12 = arith.cmpi ne, %11, %c0_i32_9 : i32
    scf.if %12 {
      %c0_12 = arith.constant 0 : index
      %c0_13 = arith.constant 0 : index
      %16 = vector.load %arg6[%c0_12, %c0_13] : memref<1x128xf32, #tpu.memory_space<vmem>>, vector<1x128xf32>
      %17 = vector.broadcast %16 : vector<1x128xf32> to vector<16x128xf32>
      %18 = arith.addf %9, %17 : vector<16x128xf32>
      %c0_14 = arith.constant 0 : index
      %c0_15 = arith.constant 0 : index
      %19 = vector.load %arg7[%c0_14, %c0_15] : memref<16x128xf32, #tpu.memory_space<vmem>>, vector<16x128xf32>
      tpu.vector_store %arg7[%c0_14, %c0_15], %18 {strides = array<i32>} : memref<16x128xf32, #tpu.memory_space<vmem>>, vector<16x128xf32>,
    } else {
    }
    %c0_i32_10 = arith.constant 0 : i32
    %13 = arith.cmpi ne, %arg1, %c0_i32_10 : i32
    %14 = arith.extui %13 : i1 to i32
    %c0_i32_11 = arith.constant 0 : i32
    %15 = arith.cmpi ne, %14, %c0_i32_11 : i32
    scf.if %15 {
      %c0_12 = arith.constant 0 : index
      %c0_13 = arith.constant 0 : index
      %16 = vector.load %arg7[%c0_12, %c0_13] : memref<16x128xf32, #tpu.memory_space<vmem>>, vector<16x128xf32>
      %17 = arith.addf %16, %9 : vector<16x128xf32>
      %c0_14 = arith.constant 0 : index
      %c0_15 = arith.constant 0 : index
      %18 = vector.load %arg7[%c0_14, %c0_15] : memref<16x128xf32, #tpu.memory_space<vmem>>, vector<16x128xf32>
      tpu.vector_store %arg7[%c0_14, %c0_15], %17 {strides = array<i32>} : memref<16x128xf32, #tpu.memory_space<vmem>>, vector<16x128xf32>,
    } else {
    }
    return
  }
  func.func @transform_0(%arg0: i32, %arg1: i32) -> (i32, i32) {
    %c0_i32 = arith.constant 0 : i32
    %c0_i32_0 = arith.constant 0 : i32
    return %arg0, %c0_i32 : i32, i32
  }
  func.func @transform_1(%arg0: i32, %arg1: i32) -> (i32, i32) {
    %c2_i32 = arith.constant 2 : i32
    %c0_i32 = arith.constant 0 : i32
    %0 = arith.cmpi eq, %c2_i32, %c0_i32 : i32
    %c1_i32 = arith.constant 1 : i32
    %1 = arith.select %0, %c1_i32, %c2_i32 : i32
    %2 = arith.remsi %arg0, %1 : i32
    %c0_i32_0 = arith.constant 0 : i32
    %3 = arith.cmpi ne, %2, %c0_i32_0 : i32
    %c0_i32_1 = arith.constant 0 : i32
    %4 = arith.cmpi slt, %2, %c0_i32_1 : i32
    %c0_i32_2 = arith.constant 0 : i32
    %5 = arith.cmpi slt, %1, %c0_i32_2 : i32
    %6 = arith.xori %4, %5 : i1
    %7 = arith.andi %6, %3 : i1
    %8 = arith.addi %2, %1 : i32
    %9 = arith.select %7, %8, %2 : i32
    %c2_i32_3 = arith.constant 2 : i32
    %10 = arith.muli %c2_i32_3, %arg1 : i32
    %c0_i32_4 = arith.constant 0 : i32
    %11 = arith.subi %c0_i32_4, %10 : i32
    %12 = arith.muli %9, %11 : i32
    %13 = arith.addi %arg1, %12 : i32
    %c0_i32_5 = arith.constant 0 : i32
    %c0_i32_6 = arith.constant 0 : i32
    return %c0_i32_5, %13 : i32, i32
  }
  func.func @transform_2(%arg0: i32, %arg1: i32) -> (i32, i32) {
    %c2_i32 = arith.constant 2 : i32
    %c0_i32 = arith.constant 0 : i32
    %0 = arith.cmpi eq, %c2_i32, %c0_i32 : i32
    %c1_i32 = arith.constant 1 : i32
    %1 = arith.select %0, %c1_i32, %c2_i32 : i32
    %2 = arith.remsi %arg0, %1 : i32
    %c0_i32_0 = arith.constant 0 : i32
    %3 = arith.cmpi ne, %2, %c0_i32_0 : i32
    %c0_i32_1 = arith.constant 0 : i32
    %4 = arith.cmpi slt, %2, %c0_i32_1 : i32
    %c0_i32_2 = arith.constant 0 : i32
    %5 = arith.cmpi slt, %1, %c0_i32_2 : i32
    %6 = arith.xori %4, %5 : i1
    %7 = arith.andi %6, %3 : i1
    %8 = arith.addi %2, %1 : i32
    %9 = arith.select %7, %8, %2 : i32
    %c2_i32_3 = arith.constant 2 : i32
    %10 = arith.muli %c2_i32_3, %arg1 : i32
    %c0_i32_4 = arith.constant 0 : i32
    %11 = arith.subi %c0_i32_4, %10 : i32
    %12 = arith.muli %9, %11 : i32
    %13 = arith.addi %arg1, %12 : i32
    %c0_i32_5 = arith.constant 0 : i32
    %c0_i32_6 = arith.constant 0 : i32
    return %c0_i32_5, %13 : i32, i32
  }
  func.func @transform_3(%arg0: i32, %arg1: i32) -> (i32, i32) {
    %c2_i32 = arith.constant 2 : i32
    %c0_i32 = arith.constant 0 : i32
    %0 = arith.cmpi eq, %c2_i32, %c0_i32 : i32
    %c1_i32 = arith.constant 1 : i32
    %1 = arith.select %0, %c1_i32, %c2_i32 : i32
    %2 = arith.remsi %arg0, %1 : i32
    %c0_i32_0 = arith.constant 0 : i32
    %3 = arith.cmpi ne, %2, %c0_i32_0 : i32
    %c0_i32_1 = arith.constant 0 : i32
    %4 = arith.cmpi slt, %2, %c0_i32_1 : i32
    %c0_i32_2 = arith.constant 0 : i32
    %5 = arith.cmpi slt, %1, %c0_i32_2 : i32
    %6 = arith.xori %4, %5 : i1
    %7 = arith.andi %6, %3 : i1
    %8 = arith.addi %2, %1 : i32
    %9 = arith.select %7, %8, %2 : i32
    %c2_i32_3 = arith.constant 2 : i32
    %10 = arith.muli %c2_i32_3, %arg1 : i32
    %c0_i32_4 = arith.constant 0 : i32
    %11 = arith.subi %c0_i32_4, %10 : i32
    %12 = arith.muli %9, %11 : i32
    %13 = arith.addi %arg1, %12 : i32
    %c0_i32_5 = arith.constant 0 : i32
    %c0_i32_6 = arith.constant 0 : i32
    return %13, %c0_i32_5 : i32, i32
  }
  func.func @transform_4(%arg0: i32, %arg1: i32) -> (i32, i32) {
    %c0_i32 = arith.constant 0 : i32
    %c0_i32_0 = arith.constant 0 : i32
    %c0_i32_1 = arith.constant 0 : i32
    return %c0_i32, %c0_i32_0 : i32, i32
  }
  func.func @transform_5(%arg0: i32, %arg1: i32) -> (i32, i32) {
    %c0_i32 = arith.constant 0 : i32
    %c0_i32_0 = arith.constant 0 : i32
    return %arg0, %c0_i32 : i32, i32
  }
}

</mosaic_0001>

<llo_original>
// kernel: tpu_custom_call.1
$region0: #{tpu_custom_call.1}
  #allocation0 [shape = 'u32[]', space=smem, size = 0x4, offset = 0x4, fixed_abs, tag = 'smem constant byte address 0x4 - core index']
  #allocation1 [shape = 'u32[72,128]{1,0:T(1,128)}', space=vmem, size = 0x9000, scoped, tag = 'internal scratch']
  %s0 = inlined_call_operand.hbm [shape: f32[16,128], index: 0, kind: input, shape index: {}]
  %s1 = inlined_call_operand.hbm [shape: f32[128,128], index: 1, kind: input, shape index: {}]
  %s2 = inlined_call_operand.vmem [shape: f32[1,128], index: 2, kind: input, shape index: {}]
  %s3 = inlined_call_operand.hbm [shape: f32[128,128], index: 3, kind: input, shape index: {}]
  %s4 = inlined_call_operand.vmem [shape: f32[1,128], index: 4, kind: input, shape index: {}]
  %s5 = inlined_call_operand.hbm [shape: f32[16,128], index: 5, kind: output, shape index: {}]
  %s6 = sld [smem:[#allocation0]]
  $region50: #{tpu_custom_call.1} parent=0
    _
  %s8 = ssub.s32 1, %s6
  %s9 = scalar_select 0, %s8, %s6
  $region1: #{tpu_custom_call.1} parent=0
    #allocation2 [shape = 'u8[8192]{0}', space=vmem, size = 0x2000, scoped, tag = 'input window, operand 0, single buffered']
    #allocation3 [shape = 's32[1]{0}', space=sflag, size = 0x4, scoped, tag = 'scoped memory for tpu_custom_call.1']
    #allocation4 [shape = 's32[1]{0}', space=sflag, size = 0x4, scoped, tag = 'scoped memory for tpu_custom_call.1']
    #allocation5 [shape = 'u8[65536]{0}', space=vmem, size = 0x10000, scoped, tag = 'input window, operand 1, single buffered']
    #allocation6 [shape = 's32[1]{0}', space=sflag, size = 0x4, scoped, tag = 'scoped memory for tpu_custom_call.1']
    #allocation7 [shape = 'u8[65536]{0}', space=vmem, size = 0x10000, scoped, tag = 'input window, operand 3, single buffered']
    #allocation8 [shape = 'u8[8192]{0}', space=vmem, size = 0x2000, scoped, tag = 'output window, operand 0, single buffered']
    %10 = vsyncpa [#allocation3], 0
    %11 = vsyncpa [#allocation6], 0
    %12 = vsyncpa [#allocation4], 0
    // Predicated region
    $region2: #{tpu_custom_call.1} parent=1 // pred_check
      _
    $region3: #{tpu_custom_call.1} parent=1 // pred_check_branch
      %14 = sbr.rel (0) target = $region5
    $region4: #{tpu_custom_call.1} parent=1 // pred_region
      %16 = vsyncadd [#allocation3], 0
      %s17 = sshll.u32 %s0, 4
      %s18 = int_to_ptr.hbm [resolvable:$true] %s17
      %s19 = sshll.u32 [#allocation2], 4
      %s20 = int_to_ptr.vmem [resolvable:$true] %s19
      %25 = dma.hbm_to_vmem [thread:$0]  %s18, 256, %s20, [#allocation3], 128, 128, 8
    $region5: #{tpu_custom_call.1} parent=1 // pred_fallthru
      _
    // Predicated region
    $region6: #{tpu_custom_call.1} parent=1 // pred_check
      _
    $region7: #{tpu_custom_call.1} parent=1 // pred_check_branch
      %27 = sbr.rel (0) target = $region9
    $region8: #{tpu_custom_call.1} parent=1 // pred_region
      %s28 = ssub.s32 0, 0
      %s29 = ssub.s32 0, 0
      %p30 = scmp.ne.s32.totalorder 0, 0
      %p31 = scmp.lt.s32.totalorder 0, 0
      %p32 = pnand %p31, %p30
      %p33 = pneg %p32
      %s34 = sadd.s32 0, 2
      %s35 = scalar_select %p33, %s34, 0
      %s36 = smul.u32 0, 2
      %s37 = ssub.s32 0, %s36
      %s38 = smul.u32 %s35, %s37
      %s39 = sadd.s32 0, %s38
      %41 = vsyncadd [#allocation6], 0
      %s42 = smul.addr %s39, 8
      %s43 = scalar_lea.hbm %s1, %s42
      %s44 = sshll.u32 %s43, 4
      %s45 = int_to_ptr.hbm [resolvable:$true] %s44
      %s46 = sshll.u32 [#allocation5], 4
      %s47 = int_to_ptr.vmem [resolvable:$true] %s46
      %52 = dma.hbm_to_vmem [thread:$0]  %s45, 2048, %s47, [#allocation6], 128, 128, 8
    $region9: #{tpu_custom_call.1} parent=1 // pred_fallthru
      _
    // Predicated region
    $region10: #{tpu_custom_call.1} parent=1 // pred_check
      _
    $region11: #{tpu_custom_call.1} parent=1 // pred_check_branch
      %54 = sbr.rel (0) target = $region13
    $region12: #{tpu_custom_call.1} parent=1 // pred_region
      %s55 = ssub.s32 0, 0
      %s56 = ssub.s32 0, 0
      %p57 = scmp.ne.s32.totalorder 0, 0
      %p58 = scmp.lt.s32.totalorder 0, 0
      %p59 = pnand %p58, %p57
      %p60 = pneg %p59
      %s61 = sadd.s32 0, 2
      %s62 = scalar_select %p60, %s61, 0
      %s63 = smul.u32 0, 2
      %s64 = ssub.s32 0, %s63
      %s65 = smul.u32 %s62, %s64
      %s66 = sadd.s32 0, %s65
      %p67 = scmp.lt.s32.totalorder %s66, 0
      %s68 = scalar_select %p67, %s66, 0
      %s69 = scalar_lea.vmem %s2, %s68
      %s70 = ssub.s32 0, 0
      %s71 = ssub.s32 0, 0
      %p72 = scmp.ne.s32.totalorder 0, 0
      %p73 = scmp.lt.s32.totalorder 0, 0
      %p74 = pnand %p73, %p72
      %p75 = pneg %p74
      %s76 = sadd.s32 0, 2
      %s77 = scalar_select %p75, %s76, 0
      %s78 = smul.u32 0, 2
      %s79 = ssub.s32 0, %s78
      %s80 = smul.u32 %s77, %s79
      %s81 = sadd.s32 0, %s80
    $region13: #{tpu_custom_call.1} parent=1 // pred_fallthru
      _
    // Predicated region
    $region14: #{tpu_custom_call.1} parent=1 // pred_check
      _
    $region15: #{tpu_custom_call.1} parent=1 // pred_check_branch
      %83 = sbr.rel (0) target = $region17
    $region16: #{tpu_custom_call.1} parent=1 // pred_region
      %s84 = ssub.s32 0, 0
      %s85 = ssub.s32 0, 0
      %p86 = scmp.ne.s32.totalorder 0, 0
      %p87 = scmp.lt.s32.totalorder 0, 0
      %p88 = pnand %p87, %p86
      %p89 = pneg %p88
      %s90 = sadd.s32 0, 2
      %s91 = scalar_select %p89, %s90, 0
      %s92 = smul.u32 0, 2
      %s93 = ssub.s32 0, %s92
      %s94 = smul.u32 %s91, %s93
      %s95 = sadd.s32 0, %s94
      %s96 = smul.u32 16, %s95
      %98 = vsyncadd [#allocation6], 0
      %s99 = smul.addr %s96, 8
      %s100 = scalar_lea.hbm %s3, %s99
      %s101 = sshll.u32 %s100, 4
      %s102 = int_to_ptr.hbm [resolvable:$true] %s101
      %s103 = sshll.u32 [#allocation7], 4
      %s104 = int_to_ptr.vmem [resolvable:$true] %s103
      %109 = dma.hbm_to_vmem [thread:$0]  %s102, 2048, %s104, [#allocation6], 128, 128, 8
    $region17: #{tpu_custom_call.1} parent=1 // pred_fallthru
      _
    // Predicated region
    $region18: #{tpu_custom_call.1} parent=1 // pred_check
      _
    $region19: #{tpu_custom_call.1} parent=1 // pred_check_branch
      %111 = sbr.rel (0) target = $region21
    $region20: #{tpu_custom_call.1} parent=1 // pred_region
      _
    $region21: #{tpu_custom_call.1} parent=1 // pred_fallthru
      _
    // Predicated region
    $region22: #{tpu_custom_call.1} parent=1 // pred_check
      _
    $region23: #{tpu_custom_call.1} parent=1 // pred_check_branch
      %113 = sbr.rel (0) target = $region25
    $region24: #{tpu_custom_call.1} parent=1 // pred_region
      %115 = dma.done [#allocation3], 256
    $region25: #{tpu_custom_call.1} parent=1 // pred_fallthru
      _
    // Predicated region
    $region26: #{tpu_custom_call.1} parent=1 // pred_check
      _
    $region27: #{tpu_custom_call.1} parent=1 // pred_check_branch
      %117 = sbr.rel (0) target = $region29
    $region28: #{tpu_custom_call.1} parent=1 // pred_region
      %119 = dma.done [#allocation6], 2048
    $region29: #{tpu_custom_call.1} parent=1 // pred_fallthru
      _
    // Predicated region
    $region30: #{tpu_custom_call.1} parent=1 // pred_check
      _
    $region31: #{tpu_custom_call.1} parent=1 // pred_check_branch
      %121 = sbr.rel (0) target = $region33
    $region32: #{tpu_custom_call.1} parent=1 // pred_region
      %123 = dma.done [#allocation6], 2048
    $region33: #{tpu_custom_call.1} parent=1 // pred_fallthru
      _
    %s124 = ssub.s32 0, 0
    %s125 = ssub.s32 0, 0
    %p126 = scmp.ne.s32.totalorder 0, 0
    %p127 = scmp.lt.s32.totalorder 0, 0
    %p128 = pnand %p127, %p126
    %p129 = pneg %p128
    %s130 = sadd.s32 0, 2
    %s131 = scalar_select %p129, %s130, 0
    %s132 = smul.u32 0, 2
    %s133 = ssub.s32 0, %s132
    %s134 = smul.u32 %s131, %s133
    %s135 = sadd.s32 0, %s134
    %p136 = scmp.lt.s32.totalorder %s135, 0
    %s137 = scalar_select %p136, %s135, 0
    %s138 = scalar_lea.vmem %s2, %s137
    %s139 = ssub.s32 0, 0
    %s140 = ssub.s32 0, 0
    %p141 = scmp.ne.s32.totalorder 0, 0
    %p142 = scmp.lt.s32.totalorder 0, 0
    %p143 = pnand %p142, %p141
    %p144 = pneg %p143
    %s145 = sadd.s32 0, 2
    %s146 = scalar_select %p144, %s145, 0
    %s147 = smul.u32 0, 2
    %s148 = ssub.s32 0, %s147
    %s149 = smul.u32 %s146, %s148
    %s150 = sadd.s32 0, %s149
    %s151 = ssub.s32 0, 0
    %s152 = ssub.s32 0, 0
    %p153 = scmp.ne.s32.totalorder 0, 0
    %p154 = scmp.lt.s32.totalorder 0, 0
    %p155 = pnand %p154, %p153
    %p156 = pneg %p155
    %s157 = sadd.s32 0, 2
    %s158 = scalar_select %p156, %s157, 0
    %s159 = smul.u32 0, 2
    %s160 = ssub.s32 0, %s159
    %s161 = smul.u32 %s158, %s160
    %s162 = sadd.s32 0, %s161
    %p163 = scmp.lt.s32.totalorder %s162, 0
    %s164 = scalar_select %p163, %s162, 0
    %s165 = scalar_lea.vmem %s2, %s164
    %s166 = ssub.s32 0, 0
    %s167 = ssub.s32 0, 0
    %p168 = scmp.ne.s32.totalorder 0, 0
    %p169 = scmp.lt.s32.totalorder 0, 0
    %p170 = pnand %p169, %p168
    %p171 = pneg %p170
    %s172 = sadd.s32 0, 2
    %s173 = scalar_select %p171, %s172, 0
    %s174 = smul.u32 0, 2
    %s175 = ssub.s32 0, %s174
    %s176 = smul.u32 %s173, %s175
    %s177 = sadd.s32 0, %s176
    %s178 = ssub.s32 0, 0
    %s179 = ssub.s32 0, 0
    %p180 = scmp.ne.s32.totalorder 0, 0
    %p181 = scmp.lt.s32.totalorder 0, 0
    %p182 = pnand %p181, %p180
    %p183 = pneg %p182
    %s184 = sadd.s32 0, 2
    %s185 = scalar_select %p183, %s184, 0
    %s186 = smul.u32 0, 2
    %s187 = ssub.s32 0, %s186
    %s188 = smul.u32 %s185, %s187
    %s189 = sadd.s32 0, %s188
    %s190 = smul.u32 16, %s189
    %v191 = vld [vmem:[#allocation2] sm:$0xff]
    %v192 = vld [vmem:[#allocation2 + $0x8] sm:$0xff]
    %v193 = vld [vmem:[#allocation5] sm:$0xff]
    %v194 = vld [vmem:[#allocation5 + $0x8] sm:$0xff]
    %v195 = vld [vmem:[#allocation5 + $0x10] sm:$0xff]
    %v196 = vld [vmem:[#allocation5 + $0x18] sm:$0xff]
    %v197 = vld [vmem:[#allocation5 + $0x20] sm:$0xff]
    %v198 = vld [vmem:[#allocation5 + $0x28] sm:$0xff]
    %v199 = vld [vmem:[#allocation5 + $0x30] sm:$0xff]
    %v200 = vld [vmem:[#allocation5 + $0x38] sm:$0xff]
    %v201 = vld [vmem:[#allocation5 + $0x40] sm:$0xff]
    %v202 = vld [vmem:[#allocation5 + $0x48] sm:$0xff]
    %v203 = vld [vmem:[#allocation5 + $0x50] sm:$0xff]
    %v204 = vld [vmem:[#allocation5 + $0x58] sm:$0xff]
    %v205 = vld [vmem:[#allocation5 + $0x60] sm:$0xff]
    %v206 = vld [vmem:[#allocation5 + $0x68] sm:$0xff]
    %v207 = vld [vmem:[#allocation5 + $0x70] sm:$0xff]
    %v208 = vld [vmem:[#allocation5 + $0x78] sm:$0xff]
    %v209 = vld [vmem:[%s165] sm:$0x1]
    %v211 = vperm.slane %v209, 0
    %213 = vmatpush.msra.mxu0 %v208
    %214 = vmatpush.msra.mxu0 %v207
    %215 = vmatpush.msra.mxu0 %v206
    %216 = vmatpush.msra.mxu0 %v205
    %217 = vmatpush.msra.mxu0 %v204
    %218 = vmatpush.msra.mxu0 %v203
    %219 = vmatpush.msra.mxu0 %v202
    %220 = vmatpush.msra.mxu0 %v201
    %221 = vmatpush.msra.mxu0 %v200
    %222 = vmatpush.msra.mxu0 %v199
    %223 = vmatpush.msra.mxu0 %v198
    %224 = vmatpush.msra.mxu0 %v197
    %225 = vmatpush.msra.mxu0 %v196
    %226 = vmatpush.msra.mxu0 %v195
    %227 = vmatpush.msra.mxu0 %v194
    %228 = vmatpush.msra.mxu0 %v193
    %229 = vmatmul.f32.gmra.mxu0 %v191
    %v230 = vpop.f32.mrf.mxu0
    %v231 = vadd.f32 %v211, %v230
    %232 = vmatmul.f32.gmra.mxu0 %v192
    %v233 = vpop.f32.mrf.mxu0
    %v234 = vadd.f32 %v211, %v233
    %235 = vdwg.mxu0
    %v236 = vmax.f32 %v231, 0.0
    %v237 = vmax.f32 %v234, 0.0
    %v238 = vld [vmem:[#allocation7] sm:$0xff]
    %v239 = vld [vmem:[#allocation7 + $0x8] sm:$0xff]
    %v240 = vld [vmem:[#allocation7 + $0x10] sm:$0xff]
    %v241 = vld [vmem:[#allocation7 + $0x18] sm:$0xff]
    %v242 = vld [vmem:[#allocation7 + $0x20] sm:$0xff]
    %v243 = vld [vmem:[#allocation7 + $0x28] sm:$0xff]
    %v244 = vld [vmem:[#allocation7 + $0x30] sm:$0xff]
    %v245 = vld [vmem:[#allocation7 + $0x38] sm:$0xff]
    %v246 = vld [vmem:[#allocation7 + $0x40] sm:$0xff]
    %v247 = vld [vmem:[#allocation7 + $0x48] sm:$0xff]
    %v248 = vld [vmem:[#allocation7 + $0x50] sm:$0xff]
    %v249 = vld [vmem:[#allocation7 + $0x58] sm:$0xff]
    %v250 = vld [vmem:[#allocation7 + $0x60] sm:$0xff]
    %v251 = vld [vmem:[#allocation7 + $0x68] sm:$0xff]
    %v252 = vld [vmem:[#allocation7 + $0x70] sm:$0xff]
    %v253 = vld [vmem:[#allocation7 + $0x78] sm:$0xff]
    %254 = vmatpush.msra.mxu0 %v253
    %255 = vmatpush.msra.mxu0 %v252
    %256 = vmatpush.msra.mxu0 %v251
    %257 = vmatpush.msra.mxu0 %v250
    %258 = vmatpush.msra.mxu0 %v249
    %259 = vmatpush.msra.mxu0 %v248
    %260 = vmatpush.msra.mxu0 %v247
    %261 = vmatpush.msra.mxu0 %v246
    %262 = vmatpush.msra.mxu0 %v245
    %263 = vmatpush.msra.mxu0 %v244
    %264 = vmatpush.msra.mxu0 %v243
    %265 = vmatpush.msra.mxu0 %v242
    %266 = vmatpush.msra.mxu0 %v241
    %267 = vmatpush.msra.mxu0 %v240
    %268 = vmatpush.msra.mxu0 %v239
    %269 = vmatpush.msra.mxu0 %v238
    %270 = vmatmul.f32.gmra.mxu0 %v236
    %v271 = vpop.f32.mrf.mxu0
    %v272 = vadd.f32 0.0, %v271
    %273 = vmatmul.f32.gmra.mxu0 %v237
    %v274 = vpop.f32.mrf.mxu0
    %v275 = vadd.f32 0.0, %v274
    %276 = vdwg.mxu0
    %p277 = scmp.eq.s32.totalorder 0, 0
    // Predicated region
    $region34: #{tpu_custom_call.1} parent=1 // pred_check
      %p278 = pneg %p277
    $region35: #{tpu_custom_call.1} parent=1 // pred_check_branch
      %280 = sbr.rel (%p278) target = $region37
    $region36: #{tpu_custom_call.1} parent=1 // pred_region
      %v281 = vld [vmem:[%s4] sm:$0x1]
      %v283 = vperm.slane %v281, 0
      %v285 = vadd.f32 %v272, %v283
      %v286 = vadd.f32 %v275, %v283
      %287 = vst [vmem:[#allocation8] sm:$0xff] %v285
      %288 = vst [vmem:[#allocation8 + $0x8] sm:$0xff] %v286
    $region37: #{tpu_custom_call.1} parent=1 // pred_fallthru
      _
    %p289 = scmp.ne.s32.totalorder 0, 0
    // Predicated region
    $region38: #{tpu_custom_call.1} parent=1 // pred_check
      %p290 = pneg %p289
    $region39: #{tpu_custom_call.1} parent=1 // pred_check_branch
      %292 = sbr.rel (%p290) target = $region41
    $region40: #{tpu_custom_call.1} parent=1 // pred_region
      %v293 = vld [vmem:[#allocation8] sm:$0xff]
      %v294 = vld [vmem:[#allocation8 + $0x8] sm:$0xff]
      %v295 = vadd.f32 %v293, %v272
      %v296 = vadd.f32 %v294, %v275
      %297 = vst [vmem:[#allocation8] sm:$0xff] %v295
      %298 = vst [vmem:[#allocation8 + $0x8] sm:$0xff] %v296
    $region41: #{tpu_custom_call.1} parent=1 // pred_fallthru
      _
    // Predicated region
    $region42: #{tpu_custom_call.1} parent=1 // pred_check
      _
    $region43: #{tpu_custom_call.1} parent=1 // pred_check_branch
      %300 = sbr.rel (0) target = $region45
    $region44: #{tpu_custom_call.1} parent=1 // pred_region
      %302 = vsyncadd [#allocation4], 0
      %s303 = sshll.u32 [#allocation8], 4
      %s304 = int_to_ptr.vmem [resolvable:$true] %s303
      %s305 = sshll.u32 %s5, 4
      %s306 = int_to_ptr.hbm [resolvable:$true] %s305
      %311 = dma.vmem_to_hbm [thread:$0]  %s304, 256, %s306, [#allocation4], 128, 128, 8
    $region45: #{tpu_custom_call.1} parent=1 // pred_fallthru
      _
    // Predicated region
    $region46: #{tpu_custom_call.1} parent=1 // pred_check
      _
    $region47: #{tpu_custom_call.1} parent=1 // pred_check_branch
      %313 = sbr.rel (0) target = $region49
    $region48: #{tpu_custom_call.1} parent=1 // pred_region
      %315 = dma.done [#allocation4], 256
    $region49: #{tpu_custom_call.1} parent=1 // pred_fallthru
      _
    %316 = vsyncpa [#allocation3], 1
    %317 = vsyncpa [#allocation6], 1
    %318 = vsyncpa [#allocation4], 1

</llo_original>
